<compile_context>
chip_gen: v7x
topology: tpu7x:2x2x1
jax: 0.10.0
libtpu: 0.0.40
codegen_flags: <defaults>
</compile_context>

<pallas_src>
import functools

import jax
import jax.numpy as jnp
from jax import lax
from jax.experimental import pallas as pl
from jax.experimental.pallas import tpu as pltpu


def _round_up(x, m):
    return (x + m - 1) // m * m


def _device_kind():
    try:
        return jax.devices()[0].device_kind.lower()
    except Exception:
        return ""


def _vmem_capacity_bytes():
    try:
        info = pltpu.get_tpu_info()
        cap = getattr(info, "vmem_capacity_bytes", None)
        if cap:
            return int(cap)
    except Exception:
        pass
    return 64 * 1024 * 1024  # conservative fallback (v7x per-TC VMEM)


def _choose(dim, target, align, prefer=None):
    """Pick (tile, padded_dim, num_tiles).

    Tile is a multiple of `align` (rounded further to `prefer` when >= prefer);
    the dim is padded up to a multiple of the tile, so there is no divisor
    constraint that collapses the tile size.  Whole-dim tiles are used when the
    (aligned) dim fits under `target`.
    """
    dmin = _round_up(dim, align)
    if dmin <= target:
        return dmin, dmin, 1
    n_tiles = -(-dmin // target)                       # ceil
    tile = _round_up(-(-dmin // n_tiles), align)
    if prefer is not None and tile >= prefer and tile % prefer != 0:
        tile = _round_up(tile, prefer)
    return tile, tile * n_tiles, n_tiles


def plan_fc(batch, input_dim, output_dim, dtype,
            tm_target=512, tn_target=512, tk_target=2048):
    """Per-shape / per-generation tiling plan for the FC kernel."""
    dtype = jnp.dtype(dtype)
    itemsize = dtype.itemsize
    m_align = {4: 8, 2: 16, 1: 32}.get(itemsize, 8)    # dtype-aware sublane packing

    phys_vmem = _vmem_capacity_bytes()
    # Resident (double-buffered) tile budget ~1/3 of physical VMEM, capped so a
    # 128 MiB chip stays sane; v7x (64 MiB) lands around 21 MiB.
    tile_budget = min(phys_vmem // 3, 40 * 1024 * 1024)
    vmem_limit = min((phys_vmem * 3) // 4, 96 * 1024 * 1024)

    tm_t, tn_t, tk_t = tm_target, tn_target, tk_target
    while True:
        tm, M_pad, gm = _choose(batch, tm_t, m_align)
        tn, N_pad, gn = _choose(output_dim, tn_t, 128, prefer=256)
        tk, K_pad, gk = _choose(input_dim, tk_t, 128)
        foot = 2 * (tm * tk + tk * tn + tn) * itemsize + 2 * tm * tn * itemsize
        if gk > 1:
            foot += tm * tn * 4                         # f32 accumulator scratch
        if foot <= tile_budget:
            break
        # Shrink targets until the double-buffered footprint fits.
        if tk_t > 512:
            tk_t //= 2
        elif tn_t > 256:
            tn_t //= 2
        elif tm_t > 128:
            tm_t //= 2
        elif tk_t > 128:
            tk_t //= 2
        elif tn_t > 128:
            tn_t //= 2
        elif tm_t > m_align:
            tm_t = max(m_align, tm_t // 2)
        else:
            break

    # v7x megacore: guarantee at least one "parallel" axis has >= 2 tiles.
    # Costs ~nothing on 1-TC v5e/v6e, so do it unconditionally when possible.
    if gm * gn == 1:
        if M_pad >= 2 * m_align:
            gm = 2
            tm = _round_up(-(-M_pad // 2), m_align)
            M_pad = gm * tm
        elif tn >= 256 and tn % 256 == 0:
            gn, tn = 2, tn // 2

    return dict(batch=batch, input_dim=input_dim, output_dim=output_dim,
                dtype=dtype, tm=tm, tn=tn, tk=tk,
                M_pad=M_pad, N_pad=N_pad, K_pad=K_pad,
                gm=gm, gn=gn, gk=gk, vmem_limit=vmem_limit)


def prepare_fc_params(weight, bias, plan):
    """One-time parameter prep (hoisted out of the per-call path):
    transpose PyTorch [out_dim, in_dim] weight to [K, N] and zero-pad
    weight/bias to the plan's padded dims."""
    N, K = weight.shape
    assert (N, K) == (plan["output_dim"], plan["input_dim"])
    w_kn = weight.T                                     # [K, N]
    if (plan["K_pad"], plan["N_pad"]) != (K, N):
        w_kn = jnp.pad(w_kn, ((0, plan["K_pad"] - K), (0, plan["N_pad"] - N)))
    b = bias
    if plan["N_pad"] != N:
        b = jnp.pad(b, (0, plan["N_pad"] - N))
    return w_kn, b.reshape(1, plan["N_pad"])


def _fc_kernel_fullk(x_ref, w_ref, b_ref, o_ref, *, apply_tanh):
    """Whole-K in one step: dot + bias straight to o_ref (no accumulator)."""
    x = x_ref[...]
    if apply_tanh:
        x = jnp.tanh(x)                                 # EUP transcendental
    acc = jnp.dot(x, w_ref[...], preferred_element_type=jnp.float32)
    o_ref[...] = (acc + b_ref[...].astype(jnp.float32)).astype(o_ref.dtype)


def _fc_kernel_ksplit(x_ref, w_ref, b_ref, o_ref, acc_ref, *, apply_tanh):
    """K split across grid axis 2: resident f32 accumulator, init/finalize."""
    k = pl.program_id(2)

    @pl.when(k == 0)
    def _():
        acc_ref[...] = jnp.zeros_like(acc_ref)

    x = x_ref[...]
    if apply_tanh:
        x = jnp.tanh(x)
    acc_ref[...] += jnp.dot(x, w_ref[...], preferred_element_type=jnp.float32)

    @pl.when(k == pl.num_programs(2) - 1)
    def _():
        o_ref[...] = (acc_ref[...] + b_ref[...].astype(jnp.float32)).astype(o_ref.dtype)


def fc_layer_forward(x, w_kn, b2d, plan, *, use_activation=True, dropout_rate=0.0):
    """FCLayer.forward: dropout (identity at rate 0) -> optional tanh -> linear.

    x:    [B, input_dim]
    w_kn: [K_pad, N_pad]  (from prepare_fc_params; transposed + padded once)
    b2d:  [1, N_pad]
    """
    # TODO(synk): training-mode dropout (rate > 0) would use pltpu.prng_* in-kernel.
    assert dropout_rate == 0.0, "only inference / dropout_rate=0.0 is implemented"

    B, K = x.shape
    assert B == plan["batch"] and K == plan["input_dim"]
    tm, tn, tk = plan["tm"], plan["tn"], plan["tk"]
    M_pad, N_pad, K_pad = plan["M_pad"], plan["N_pad"], plan["K_pad"]
    gm, gn, gk = plan["gm"], plan["gn"], plan["gk"]

    kind = _device_kind()
    bf16_eup_ok = ("v6" in kind) or ("v7" in kind)      # v5e: no bf16 VPU/EUP
    in_kernel_tanh_ok = (x.dtype == jnp.float32) or bf16_eup_ok
    # With several N tiles an in-kernel tanh re-burns the single EUP slot once
    # per output tile -> precompute in the wrapper instead (fused with the pad).
    apply_tanh_in_kernel = bool(use_activation and gn == 1 and in_kernel_tanh_ok)

    if use_activation and not apply_tanh_in_kernel:
        x = jnp.tanh(x)
    if (M_pad, K_pad) != (B, K):
        x = jnp.pad(x, ((0, M_pad - B), (0, K_pad - K)))

    itemsize = jnp.dtype(x.dtype).itemsize
    cost = pl.CostEstimate(
        flops=2 * M_pad * N_pad * K_pad,
        transcendentals=(M_pad * K_pad * gn) if apply_tanh_in_kernel else 0,
        bytes_accessed=(M_pad * K_pad + K_pad * N_pad + N_pad + M_pad * N_pad) * itemsize,
    )

    if gk == 1:
        # Single K step: no accumulator scratch, no init/finalize branches.
        kernel = functools.partial(_fc_kernel_fullk, apply_tanh=apply_tanh_in_kernel)
        grid_spec = pltpu.PrefetchScalarGridSpec(
            num_scalar_prefetch=0,
            grid=(gm, gn),
            in_specs=[
                pl.BlockSpec((tm, K_pad), lambda i, j: (i, 0)),    # x  [M, K]
                pl.BlockSpec((K_pad, tn), lambda i, j: (0, j)),    # w  [K, N]
                pl.BlockSpec((1, tn), lambda i, j: (0, j)),        # bias
            ],
            out_specs=pl.BlockSpec((tm, tn), lambda i, j: (i, j)),
        )
        dim_sem = ("parallel", "parallel")
    else:
        kernel = functools.partial(_fc_kernel_ksplit, apply_tanh=apply_tanh_in_kernel)
        grid_spec = pltpu.PrefetchScalarGridSpec(
            num_scalar_prefetch=0,
            grid=(gm, gn, gk),
            in_specs=[
                pl.BlockSpec((tm, tk), lambda i, j, k: (i, k)),    # x  [M, K]
                pl.BlockSpec((tk, tn), lambda i, j, k: (k, j)),    # w  [K, N]
                pl.BlockSpec((1, tn), lambda i, j, k: (0, j)),     # bias
            ],
            out_specs=pl.BlockSpec((tm, tn), lambda i, j, k: (i, j)),
            scratch_shapes=[pltpu.VMEM((tm, tn), jnp.float32)],
        )
        dim_sem = ("parallel", "parallel", "arbitrary")

    out = pl.pallas_call(
        kernel,
        out_shape=jax.ShapeDtypeStruct((M_pad, N_pad), x.dtype),
        grid_spec=grid_spec,
        compiler_params=pltpu.CompilerParams(
            dimension_semantics=dim_sem,
            vmem_limit_bytes=plan["vmem_limit"],
        ),
        cost_estimate=cost,
    )(x, w_kn, b2d)

    N = plan["output_dim"]
    if (M_pad, N_pad) != (B, N):
        out = out[:B, :N]
    return out


def init_fc_params(key, input_dim, output_dim, dtype=jnp.float32):
    """Deterministic PyTorch-style nn.Linear init: U(-1/sqrt(in), 1/sqrt(in))."""
    kw, kb = jax.random.split(key)
    bound = 1.0 / jnp.sqrt(jnp.asarray(input_dim, dtype=jnp.float32))
    weight = jax.random.uniform(kw, (output_dim, input_dim), dtype,
                                minval=-bound, maxval=bound)
    bias = jax.random.uniform(kb, (output_dim,), dtype,
                              minval=-bound, maxval=bound)
    return weight, bias


if __name__ == "__main__":
    key = jax.random.PRNGKey(0)
    k_x, k_p = jax.random.split(key)

    # Small but non-trivial: K=640 (whole-K single step), N=192 pads to a
    # lane-dense 256 tile, M=32 splits into two 16-row tiles for megacore.
    B, input_dim, output_dim = 32, 640, 192
    x = jax.random.normal(k_x, (B, input_dim), jnp.float32)
    weight, bias = init_fc_params(k_p, input_dim, output_dim)

    plan = plan_fc(B, input_dim, output_dim, x.dtype)
    w_kn, b2d = prepare_fc_params(weight, bias, plan)   # one-time parameter prep

    out = fc_layer_forward(x, w_kn, b2d, plan, use_activation=True)
    out = jax.block_until_ready(out)

    # Pure-JAX reference (tanh -> linear), full-precision matmul.
    ref = jnp.dot(jnp.tanh(x), weight.T,
                  precision=lax.Precision.HIGHEST) + bias
    assert out.shape == (B, output_dim)
    max_err = float(jnp.max(jnp.abs(out - ref)))
    assert jnp.allclose(out, ref, atol=1e-4, rtol=1e-4), max_err

    print("KERNEL_OK")
</pallas_src>

<mosaic_0001>
module attributes {stable_mosaic.version = 11 : i64} {
  func.func @_fc_kernel_fullk(%arg0: i32, %arg1: i32, %arg2: memref<16x640xf32, #tpu.memory_space<vmem>>, %arg3: memref<640x256xf32, #tpu.memory_space<vmem>>, %arg4: memref<1x256xf32, #tpu.memory_space<vmem>>, %arg5: memref<16x256xf32, #tpu.memory_space<vmem>>) attributes {dimension_semantics = [#tpu.dimension_semantics<parallel>, #tpu.dimension_semantics<parallel>], iteration_bounds = array<i64: 2, 1>, scalar_prefetch = 0 : i64, scratch_operands = 0 : i64, tpu.core_type = #tpu.core_type<tc>, window_params = [{transform_indices = @transform_0, window_bounds = array<i64: 16, 640>}, {transform_indices = @transform_1, window_bounds = array<i64: 640, 256>}, {transform_indices = @transform_2, window_bounds = array<i64: 1, 256>}, {transform_indices = @transform_3, window_bounds = array<i64: 16, 256>}]} {
    %c0 = arith.constant 0 : index
    %c0_0 = arith.constant 0 : index
    %0 = vector.load %arg2[%c0, %c0_0] : memref<16x640xf32, #tpu.memory_space<vmem>>, vector<16x640xf32>
    %1 = math.tanh %0 : vector<16x640xf32>
    %c0_1 = arith.constant 0 : index
    %c0_2 = arith.constant 0 : index
    %2 = vector.load %arg3[%c0_1, %c0_2] : memref<640x256xf32, #tpu.memory_space<vmem>>, vector<640x256xf32>
    %cst = arith.constant dense<0.000000e+00> : vector<16x256xf32>
    %3 = tpu.matmul %1, %2, %cst {dimension_numbers = #tpu.dot_dimension_numbers<[1], [0], [0], [1], [0, 0, 1, 1], [], []>} : vector<16x640xf32>, vector<640x256xf32>, vector<16x256xf32> -> vector<16x256xf32>
    %c0_3 = arith.constant 0 : index
    %c0_4 = arith.constant 0 : index
    %4 = vector.load %arg4[%c0_3, %c0_4] : memref<1x256xf32, #tpu.memory_space<vmem>>, vector<1x256xf32>
    %5 = vector.broadcast %4 : vector<1x256xf32> to vector<16x256xf32>
    %6 = arith.addf %3, %5 : vector<16x256xf32>
    %c0_5 = arith.constant 0 : index
    %c0_6 = arith.constant 0 : index
    %7 = vector.load %arg5[%c0_5, %c0_6] : memref<16x256xf32, #tpu.memory_space<vmem>>, vector<16x256xf32>
    tpu.vector_store %arg5[%c0_5, %c0_6], %6 {strides = array<i32>} : memref<16x256xf32, #tpu.memory_space<vmem>>, vector<16x256xf32>,
    return
  }
  func.func @transform_0(%arg0: i32, %arg1: i32) -> (i32, i32) {
    %c0_i32 = arith.constant 0 : i32
    %c0_i32_0 = arith.constant 0 : i32
    return %arg0, %c0_i32 : i32, i32
  }
  func.func @transform_1(%arg0: i32, %arg1: i32) -> (i32, i32) {
    %c0_i32 = arith.constant 0 : i32
    %c0_i32_0 = arith.constant 0 : i32
    return %c0_i32, %arg1 : i32, i32
  }
  func.func @transform_2(%arg0: i32, %arg1: i32) -> (i32, i32) {
    %c0_i32 = arith.constant 0 : i32
    %c0_i32_0 = arith.constant 0 : i32
    return %c0_i32, %arg1 : i32, i32
  }
  func.func @transform_3(%arg0: i32, %arg1: i32) -> (i32, i32) {
    %c0_i32 = arith.constant 0 : i32
    return %arg0, %arg1 : i32, i32
  }
}

</mosaic_0001>

<llo_original>
// kernel: tpu_custom_call.1
$region0: #{tpu_custom_call.1}
  #allocation0 [shape = 'u32[]', space=smem, size = 0x4, offset = 0x4, fixed_abs, tag = 'smem constant byte address 0x4 - core index']
  #allocation1 [shape = 'u32[144,128]{1,0:T(1,128)}', space=vmem, size = 0x12000, scoped, tag = 'internal scratch']
  %s0 = inlined_call_operand.hbm [shape: f32[32,640], index: 0, kind: input, shape index: {}]
  %s1 = inlined_call_operand.hbm [shape: f32[640,256], index: 1, kind: input, shape index: {}]
  %s2 = inlined_call_operand.vmem [shape: f32[1,256], index: 2, kind: input, shape index: {}]
  %s3 = inlined_call_operand.hbm [shape: f32[32,256], index: 3, kind: output, shape index: {}]
  %s4 = sld [smem:[#allocation0]]
  $region53: #{tpu_custom_call.1} parent=0
    _
  %s6 = ssub.s32 1, %s4
  %s7 = scalar_select 0, %s6, %s4
  $region1: #{tpu_custom_call.1} parent=0
    #allocation2 [shape = 'u8[81920]{0}', space=vmem, size = 0x14000, scoped, tag = 'input window, operand 0']
    #allocation3 [shape = 's32[2]{0}', space=sflag, size = 0x8, scoped, tag = 'scoped memory for tpu_custom_call.1']
    #allocation4 [shape = 's32[2]{0}', space=sflag, size = 0x8, scoped, tag = 'scoped memory for tpu_custom_call.1']
    #allocation5 [shape = 'u8[655360]{0}', space=vmem, size = 0xa0000, scoped, tag = 'input window, operand 1, single buffered']
    #allocation6 [shape = 's32[1]{0}', space=sflag, size = 0x4, scoped, tag = 'scoped memory for tpu_custom_call.1']
    #allocation7 [shape = 'u8[32768]{0}', space=vmem, size = 0x8000, scoped, tag = 'output window, operand 0']
    %8 = vsyncpa [#allocation3], 0
    %s9 = scalar_lea.sflag [#allocation3], 1
    %10 = vsyncpa %s9, 0
    %11 = vsyncpa [#allocation6], 0
    %12 = vsyncpa [#allocation4], 0
    %s13 = scalar_lea.sflag [#allocation4], 1
    %14 = vsyncpa %s13, 0
    loop: start=0, step=1, limit=4
    $region2: #{tpu_custom_call.1} parent=1 // loop_pre_header
      _
    $region3: #{tpu_custom_call.1} parent=1 // loop_header
      %s16 = sphi 0, %s20
      %p17 = scmp.ge.s32.totalorder %s16, 4
      %s23 = sphi 0, %s35
      %s24 = sphi 0, %s31
      %s25 = sphi 0, %s23
      %s26 = sphi 0, %s24
      %s27 = sphi 0, %s25
      %s28 = sphi 0, %s26
      %s38 = sphi 0, %s40
      %s41 = sphi 0, %s38
      %s42 = sphi 0, %s41
      %s58 = sphi 0, %s42
      %s64 = sphi 0, %s66
      %s67 = sphi 0, %s64
      %s68 = sphi 0, %s67
      %s84 = sphi 0, %s68
      %s90 = sphi 0, %s92
      %s93 = sphi 0, %s90
      %s94 = sphi 0, %s93
      %s110 = sphi 0, %s94
      %s118 = sphi 0, %s120
      %s121 = sphi 0, %s118
      %s122 = sphi 0, %s121
      %s138 = sphi 0, %s122
    $region4: #{tpu_custom_call.1} parent=1 // loop_header_branch
      %19 = sbr.rel (%p17) target = $region8
    $region5: #{tpu_custom_call.1} parent=1 // loop_body
      %s21 = ssub.s32 %s16, 1
      %s22 = ssub.s32 %s16, 2
      %s29 = sadd.s32 1, %s24
      %p30 = scmp.ge.s32.totalorder %s29, 1
      %s31 = scalar_select %p30, 0, %s29
      %s32 = sadd.s32 1, %s23
      %s33 = scalar_select %p30, %s32, %s23
      %p34 = scmp.ge.s32.totalorder %s33, 2
      %s35 = scalar_select %p34, 0, %s33
      %s36 = ssub.s32 %s23, %s35
      %p37 = scmp.eq.s32.totalorder %s36, 0
      %s39 = sadd.s32 %s38, 1
      %s40 = scalar_select %p37, %s38, %s39
      %p43 = pneg %p37
      %p44 = scmp.eq.s32.totalorder %s16, 1
      %p45 = por %p43, %p44
      %p46 = scmp.ne.s32.totalorder %s38, %s41
      %p47 = scmp.eq.s32.totalorder %s16, 0
      %p48 = por %p46, %p47
      %p49 = scmp.ne.s32.totalorder %s38, %s41
      %p50 = scmp.eq.s32.totalorder %s21, 1
      %p51 = por %p49, %p50
      %p52 = scmp.ne.s32.totalorder %s41, %s42
      %p53 = scmp.eq.s32.totalorder %s21, 0
      %p54 = por %p52, %p53
      %p55 = scmp.ne.s32.totalorder %s41, %s42
      %p56 = scmp.eq.s32.totalorder %s22, 1
      %p57 = por %p55, %p56
      %p59 = scmp.ne.s32.totalorder %s42, %s58
      %p60 = scmp.eq.s32.totalorder %s22, 0
      %p61 = por %p59, %p60
      %s62 = ssub.s32 %s24, %s31
      %p63 = scmp.eq.s32.totalorder %s62, 0
      %s65 = sadd.s32 %s64, 1
      %s66 = scalar_select %p63, %s64, %s65
      %p69 = pneg %p63
      %p70 = scmp.eq.s32.totalorder %s16, 1
      %p71 = por %p69, %p70
      %p72 = scmp.ne.s32.totalorder %s64, %s67
      %p73 = scmp.eq.s32.totalorder %s16, 0
      %p74 = por %p72, %p73
      %p75 = scmp.ne.s32.totalorder %s64, %s67
      %p76 = scmp.eq.s32.totalorder %s21, 1
      %p77 = por %p75, %p76
      %p78 = scmp.ne.s32.totalorder %s67, %s68
      %p79 = scmp.eq.s32.totalorder %s21, 0
      %p80 = por %p78, %p79
      %p81 = scmp.ne.s32.totalorder %s67, %s68
      %p82 = scmp.eq.s32.totalorder %s22, 1
      %p83 = por %p81, %p82
      %p85 = scmp.ne.s32.totalorder %s68, %s84
      %p86 = scmp.eq.s32.totalorder %s22, 0
      %p87 = por %p85, %p86
      %s88 = ssub.s32 %s24, %s31
      %p89 = scmp.eq.s32.totalorder %s88, 0
      %s91 = sadd.s32 %s90, 1
      %s92 = scalar_select %p89, %s90, %s91
      %p95 = pneg %p89
      %p96 = scmp.eq.s32.totalorder %s16, 1
      %p97 = por %p95, %p96
      %p98 = scmp.ne.s32.totalorder %s90, %s93
      %p99 = scmp.eq.s32.totalorder %s16, 0
      %p100 = por %p98, %p99
      %p101 = scmp.ne.s32.totalorder %s90, %s93
      %p102 = scmp.eq.s32.totalorder %s21, 1
      %p103 = por %p101, %p102
      %p104 = scmp.ne.s32.totalorder %s93, %s94
      %p105 = scmp.eq.s32.totalorder %s21, 0
      %p106 = por %p104, %p105
      %p107 = scmp.ne.s32.totalorder %s93, %s94
      %p108 = scmp.eq.s32.totalorder %s22, 1
      %p109 = por %p107, %p108
      %p111 = scmp.ne.s32.totalorder %s94, %s110
      %p112 = scmp.eq.s32.totalorder %s22, 0
      %p113 = por %p111, %p112
      %s114 = ssub.s32 %s23, %s35
      %s115 = ssub.s32 %s24, %s31
      %s116 = sor.u32 %s114, %s115
      %p117 = scmp.eq.s32.totalorder %s116, 0
      %s119 = sadd.s32 %s118, 1
      %s120 = scalar_select %p117, %s118, %s119
      %p123 = pneg %p117
      %p124 = scmp.eq.s32.totalorder %s16, 1
      %p125 = por %p123, %p124
      %p126 = scmp.ne.s32.totalorder %s118, %s121
      %p127 = scmp.eq.s32.totalorder %s16, 0
      %p128 = por %p126, %p127
      %p129 = scmp.ne.s32.totalorder %s118, %s121
      %p130 = scmp.eq.s32.totalorder %s21, 1
      %p131 = por %p129, %p130
      %p132 = scmp.ne.s32.totalorder %s121, %s122
      %p133 = scmp.eq.s32.totalorder %s21, 0
      %p134 = por %p132, %p133
      %p135 = scmp.ne.s32.totalorder %s121, %s122
      %p136 = scmp.eq.s32.totalorder %s22, 1
      %p137 = por %p135, %p136
      %p139 = scmp.ne.s32.totalorder %s122, %s138
      %p140 = scmp.eq.s32.totalorder %s22, 0
      %p141 = por %p139, %p140
      %p142 = scmp.le.s32.totalorder 1, %s16
      %p143 = scmp.lt.s32.totalorder %s16, 3
      %p144 = pnand %p142, %p143
      %p145 = pneg %p144
      // Predicated region
      $region9: #{tpu_custom_call.1} parent=5 // pred_check
        _
      $region10: #{tpu_custom_call.1} parent=5 // pred_check_branch
        %147 = sbr.rel (%p144) target = $region12
      $region11: #{tpu_custom_call.1} parent=5 // pred_region
        %s148 = ssub.s32 %s16, 1
        // Predicated region
        $region13: #{tpu_custom_call.1} parent=11 // pred_check
          %p149 = pneg %p80
        $region14: #{tpu_custom_call.1} parent=11 // pred_check_branch
          %151 = sbr.rel (%p149) target = $region16
        $region15: #{tpu_custom_call.1} parent=11 // pred_region
          %s152 = smul.u32 2, %s26
          %s154 = ssub.s32 20480, 20480
          %155 = vsyncadd [#allocation6], %s154
          %s156 = smul.addr %s152, 128
          %s157 = scalar_lea.hbm %s1, %s156
          %s158 = sshll.u32 [#allocation5], 4
          %s159 = int_to_ptr.vmem [resolvable:$true] %s158
          %164 = dma.hbm_to_vmem [thread:$0]  %s157, 20480, %s159, [#allocation6], 256, 256, 16
        $region16: #{tpu_custom_call.1} parent=11 // pred_fallthru
          _
        // Predicated region
        $region17: #{tpu_custom_call.1} parent=11 // pred_check
          %p165 = pneg %p106
        $region18: #{tpu_custom_call.1} parent=11 // pred_check_branch
          %167 = sbr.rel (%p165) target = $region20
        $region19: #{tpu_custom_call.1} parent=11 // pred_region
          %s168 = smul.u32 2, %s26
          %p169 = scmp.lt.s32.totalorder %s168, 1
          %s170 = scalar_select %p169, %s168, 1
          %s171 = scalar_lea.vmem %s2, %s170
          %s172 = smul.u32 2, %s26
        $region20: #{tpu_custom_call.1} parent=11 // pred_fallthru
          _
      $region12: #{tpu_custom_call.1} parent=5 // pred_fallthru
        _
      %p173 = scmp.lt.s32.totalorder %s16, 2
      // Predicated region
      $region21: #{tpu_custom_call.1} parent=5 // pred_check
        %p174 = pneg %p173
      $region22: #{tpu_custom_call.1} parent=5 // pred_check_branch
        %176 = sbr.rel (%p174) target = $region24
      $region23: #{tpu_custom_call.1} parent=5 // pred_region
        // Predicated region
        $region25: #{tpu_custom_call.1} parent=23 // pred_check
          %p177 = pneg %p48
        $region26: #{tpu_custom_call.1} parent=23 // pred_check_branch
          %179 = sbr.rel (%p177) target = $region28
        $region27: #{tpu_custom_call.1} parent=23 // pred_region
          %s180 = sand.u32 %s38, 1
          %s181 = scalar_lea.sflag [#allocation3], %s180
          %s182 = sand.u32 %s38, 1
          %s183 = smul.addr %s182, 80
          %s184 = scalar_lea.vmem [#allocation2], %s183
          %s185 = smul.u32 2, %s23
          %s187 = ssub.s32 1280, 1280
          %188 = vsyncadd %s181, %s187
          %s189 = smul.addr %s185, 5
          %s190 = smul.addr %s189, 128
          %s191 = scalar_lea.hbm %s0, %s190
          %s192 = sshll.u32 %s184, 4
          %s193 = int_to_ptr.vmem [resolvable:$true] %s192
          %198 = dma.hbm_to_vmem [thread:$0]  %s191, 1280, %s193, %s181, 640, 640, 40
        $region28: #{tpu_custom_call.1} parent=23 // pred_fallthru
          _
      $region24: #{tpu_custom_call.1} parent=5 // pred_fallthru
        _
      %p199 = scmp.le.s32.totalorder 1, %s16
      %p200 = scmp.lt.s32.totalorder %s16, 3
      %p201 = pnand %p199, %p200
      %p202 = pneg %p201
      // Predicated region
      $region29: #{tpu_custom_call.1} parent=5 // pred_check
        _
      $region30: #{tpu_custom_call.1} parent=5 // pred_check_branch
        %204 = sbr.rel (%p201) target = $region32
      $region31: #{tpu_custom_call.1} parent=5 // pred_region
        %s205 = ssub.s32 %s16, 1
        %s206 = sand.u32 %s41, 1
        %s207 = scalar_lea.sflag [#allocation3], %s206
        %s208 = sand.u32 %s41, 1
        %s209 = smul.addr %s208, 80
        %s210 = scalar_lea.vmem [#allocation2], %s209
        // Predicated region
        $region33: #{tpu_custom_call.1} parent=31 // pred_check
          %p211 = pneg %p54
        $region34: #{tpu_custom_call.1} parent=31 // pred_check_branch
          %213 = sbr.rel (%p211) target = $region36
        $region35: #{tpu_custom_call.1} parent=31 // pred_region
          %214 = dma.done %s207, 1280
        $region36: #{tpu_custom_call.1} parent=31 // pred_fallthru
          _
        // Predicated region
        $region37: #{tpu_custom_call.1} parent=31 // pred_check
          %p215 = pneg %p80
        $region38: #{tpu_custom_call.1} parent=31 // pred_check_branch
          %217 = sbr.rel (%p215) target = $region40
        $region39: #{tpu_custom_call.1} parent=31 // pred_region
          %218 = dma.done [#allocation6], 20480
        $region40: #{tpu_custom_call.1} parent=31 // pred_fallthru
          _
        %s219 = sand.u32 %s41, 1
        %s220 = scalar_lea.sflag [#allocation3], %s219
        %s221 = sand.u32 %s41, 1
        %s222 = smul.addr %s221, 80
        %s223 = scalar_lea.vmem [#allocation2], %s222
        %p224 = pneg %p54
        %p225 = pneg %p51
        %p226 = pneg %p80
        %p227 = pneg %p77
        %s228 = smul.u32 2, %s26
        %p229 = scmp.lt.s32.totalorder %s228, 1
        %s230 = scalar_select %p229, %s228, 1
        %s231 = scalar_lea.vmem %s2, %s230
        %p232 = pneg %p106
        %p233 = pneg %p103
        %p234 = pneg %p134
        %p235 = pneg %p131
        %s236 = sand.u32 %s121, 1
        %s237 = scalar_lea.sflag [#allocation4], %s236
        %s238 = sand.u32 %s121, 1
        %s239 = smul.addr %s238, 32
        %s240 = scalar_lea.vmem [#allocation7], %s239
        %s241 = smul.u32 2, %s25
        %s242 = smul.u32 2, %s26
        %s243 = smul.u32 2, %s26
        %p244 = scmp.lt.s32.totalorder %s243, 1
        %s245 = scalar_select %p244, %s243, 1
        %s246 = scalar_lea.vmem %s2, %s245
        %s247 = smul.u32 2, %s26
        %s248 = smul.u32 2, %s25
        %s249 = smul.u32 2, %s26
        %v250 = vld [vmem:[%s210] sm:$0xff]
        %v251 = vld [vmem:[%s210 + $0x8] sm:$0xff]
        %v252 = vld [vmem:[%s210 + $0x10] sm:$0xff]
        %v253 = vld [vmem:[%s210 + $0x18] sm:$0xff]
        %v254 = vld [vmem:[%s210 + $0x20] sm:$0xff]
        %v255 = vld [vmem:[%s210 + $0x28] sm:$0xff]
        %v256 = vld [vmem:[%s210 + $0x30] sm:$0xff]
        %v257 = vld [vmem:[%s210 + $0x38] sm:$0xff]
        %v258 = vld [vmem:[%s210 + $0x40] sm:$0xff]
        %v259 = vld [vmem:[%s210 + $0x48] sm:$0xff]
        %v260 = vtanh.pop %v250
        %v261 = vtanh.pop %v251
        %v262 = vtanh.pop %v252
        %v263 = vtanh.pop %v253
        %v264 = vtanh.pop %v254
        %v265 = vtanh.pop %v255
        %v266 = vtanh.pop %v256
        %v267 = vtanh.pop %v257
        %v268 = vtanh.pop %v258
        %v269 = vtanh.pop %v259
        %v270 = vld [vmem:[#allocation5] sm:$0xff]
        %v271 = vld [vmem:[#allocation5 + $0x8] sm:$0xff]
        %v272 = vld [vmem:[#allocation5 + $0x10] sm:$0xff]
        %v273 = vld [vmem:[#allocation5 + $0x18] sm:$0xff]
        %v274 = vld [vmem:[#allocation5 + $0x20] sm:$0xff]
        %v275 = vld [vmem:[#allocation5 + $0x28] sm:$0xff]
        %v276 = vld [vmem:[#allocation5 + $0x30] sm:$0xff]
        %v277 = vld [vmem:[#allocation5 + $0x38] sm:$0xff]
        %v278 = vld [vmem:[#allocation5 + $0x40] sm:$0xff]
        %v279 = vld [vmem:[#allocation5 + $0x48] sm:$0xff]
        %v280 = vld [vmem:[#allocation5 + $0x50] sm:$0xff]
        %v281 = vld [vmem:[#allocation5 + $0x58] sm:$0xff]
        %v282 = vld [vmem:[#allocation5 + $0x60] sm:$0xff]
        %v283 = vld [vmem:[#allocation5 + $0x68] sm:$0xff]
        %v284 = vld [vmem:[#allocation5 + $0x70] sm:$0xff]
        %v285 = vld [vmem:[#allocation5 + $0x78] sm:$0xff]
        %v286 = vld [vmem:[#allocation5 + $0x80] sm:$0xff]
        %v287 = vld [vmem:[#allocation5 + $0x88] sm:$0xff]
        %v288 = vld [vmem:[#allocation5 + $0x90] sm:$0xff]
        %v289 = vld [vmem:[#allocation5 + $0x98] sm:$0xff]
        %v290 = vld [vmem:[#allocation5 + $0xa0] sm:$0xff]
        %v291 = vld [vmem:[#allocation5 + $0xa8] sm:$0xff]
        %v292 = vld [vmem:[#allocation5 + $0xb0] sm:$0xff]
        %v293 = vld [vmem:[#allocation5 + $0xb8] sm:$0xff]
        %v294 = vld [vmem:[#allocation5 + $0xc0] sm:$0xff]
        %v295 = vld [vmem:[#allocation5 + $0xc8] sm:$0xff]
        %v296 = vld [vmem:[#allocation5 + $0xd0] sm:$0xff]
        %v297 = vld [vmem:[#allocation5 + $0xd8] sm:$0xff]
        %v298 = vld [vmem:[#allocation5 + $0xe0] sm:$0xff]
        %v299 = vld [vmem:[#allocation5 + $0xe8] sm:$0xff]
        %v300 = vld [vmem:[#allocation5 + $0xf0] sm:$0xff]
        %v301 = vld [vmem:[#allocation5 + $0xf8] sm:$0xff]
        %v302 = vld [vmem:[#allocation5 + $0x100] sm:$0xff]
        %v303 = vld [vmem:[#allocation5 + $0x108] sm:$0xff]
        %v304 = vld [vmem:[#allocation5 + $0x110] sm:$0xff]
        %v305 = vld [vmem:[#allocation5 + $0x118] sm:$0xff]
        %v306 = vld [vmem:[#allocation5 + $0x120] sm:$0xff]
        %v307 = vld [vmem:[#allocation5 + $0x128] sm:$0xff]
        %v308 = vld [vmem:[#allocation5 + $0x130] sm:$0xff]
        %v309 = vld [vmem:[#allocation5 + $0x138] sm:$0xff]
        %v310 = vld [vmem:[#allocation5 + $0x140] sm:$0xff]
        %v311 = vld [vmem:[#allocation5 + $0x148] sm:$0xff]
        %v312 = vld [vmem:[#allocation5 + $0x150] sm:$0xff]
        %v313 = vld [vmem:[#allocation5 + $0x158] sm:$0xff]
        %v314 = vld [vmem:[#allocation5 + $0x160] sm:$0xff]
        %v315 = vld [vmem:[#allocation5 + $0x168] sm:$0xff]
        %v316 = vld [vmem:[#allocation5 + $0x170] sm:$0xff]
        %v317 = vld [vmem:[#allocation5 + $0x178] sm:$0xff]
        %v318 = vld [vmem:[#allocation5 + $0x180] sm:$0xff]
        %v319 = vld [vmem:[#allocation5 + $0x188] sm:$0xff]
        %v320 = vld [vmem:[#allocation5 + $0x190] sm:$0xff]
        %v321 = vld [vmem:[#allocation5 + $0x198] sm:$0xff]
        %v322 = vld [vmem:[#allocation5 + $0x1a0] sm:$0xff]
        %v323 = vld [vmem:[#allocation5 + $0x1a8] sm:$0xff]
        %v324 = vld [vmem:[#allocation5 + $0x1b0] sm:$0xff]
        %v325 = vld [vmem:[#allocation5 + $0x1b8] sm:$0xff]
        %v326 = vld [vmem:[#allocation5 + $0x1c0] sm:$0xff]
        %v327 = vld [vmem:[#allocation5 + $0x1c8] sm:$0xff]
        %v328 = vld [vmem:[#allocation5 + $0x1d0] sm:$0xff]
        %v329 = vld [vmem:[#allocation5 + $0x1d8] sm:$0xff]
        %v330 = vld [vmem:[#allocation5 + $0x1e0] sm:$0xff]
        %v331 = vld [vmem:[#allocation5 + $0x1e8] sm:$0xff]
        %v332 = vld [vmem:[#allocation5 + $0x1f0] sm:$0xff]
        %v333 = vld [vmem:[#allocation5 + $0x1f8] sm:$0xff]
        %v334 = vld [vmem:[#allocation5 + $0x200] sm:$0xff]
        %v335 = vld [vmem:[#allocation5 + $0x208] sm:$0xff]
        %v336 = vld [vmem:[#allocation5 + $0x210] sm:$0xff]
        %v337 = vld [vmem:[#allocation5 + $0x218] sm:$0xff]
        %v338 = vld [vmem:[#allocation5 + $0x220] sm:$0xff]
        %v339 = vld [vmem:[#allocation5 + $0x228] sm:$0xff]
        %v340 = vld [vmem:[#allocation5 + $0x230] sm:$0xff]
        %v341 = vld [vmem:[#allocation5 + $0x238] sm:$0xff]
        %v342 = vld [vmem:[#allocation5 + $0x240] sm:$0xff]
        %v343 = vld [vmem:[#allocation5 + $0x248] sm:$0xff]
        %v344 = vld [vmem:[#allocation5 + $0x250] sm:$0xff]
        %v345 = vld [vmem:[#allocation5 + $0x258] sm:$0xff]
        %v346 = vld [vmem:[#allocation5 + $0x260] sm:$0xff]
        %v347 = vld [vmem:[#allocation5 + $0x268] sm:$0xff]
        %v348 = vld [vmem:[#allocation5 + $0x270] sm:$0xff]
        %v349 = vld [vmem:[#allocation5 + $0x278] sm:$0xff]
        %v350 = vld [vmem:[#allocation5 + $0x280] sm:$0xff]
        %v351 = vld [vmem:[#allocation5 + $0x288] sm:$0xff]
        %v352 = vld [vmem:[#allocation5 + $0x290] sm:$0xff]
        %v353 = vld [vmem:[#allocation5 + $0x298] sm:$0xff]
        %v354 = vld [vmem:[#allocation5 + $0x2a0] sm:$0xff]
        %v355 = vld [vmem:[#allocation5 + $0x2a8] sm:$0xff]
        %v356 = vld [vmem:[#allocation5 + $0x2b0] sm:$0xff]
        %v357 = vld [vmem:[#allocation5 + $0x2b8] sm:$0xff]
        %v358 = vld [vmem:[#allocation5 + $0x2c0] sm:$0xff]
        %v359 = vld [vmem:[#allocation5 + $0x2c8] sm:$0xff]
        %v360 = vld [vmem:[#allocation5 + $0x2d0] sm:$0xff]
        %v361 = vld [vmem:[#allocation5 + $0x2d8] sm:$0xff]
        %v362 = vld [vmem:[#allocation5 + $0x2e0] sm:$0xff]
        %v363 = vld [vmem:[#allocation5 + $0x2e8] sm:$0xff]
        %v364 = vld [vmem:[#allocation5 + $0x2f0] sm:$0xff]
        %v365 = vld [vmem:[#allocation5 + $0x2f8] sm:$0xff]
        %v366 = vld [vmem:[#allocation5 + $0x300] sm:$0xff]
        %v367 = vld [vmem:[#allocation5 + $0x308] sm:$0xff]
        %v368 = vld [vmem:[#allocation5 + $0x310] sm:$0xff]
        %v369 = vld [vmem:[#allocation5 + $0x318] sm:$0xff]
        %v370 = vld [vmem:[#allocation5 + $0x320] sm:$0xff]
        %v371 = vld [vmem:[#allocation5 + $0x328] sm:$0xff]
        %v372 = vld [vmem:[#allocation5 + $0x330] sm:$0xff]
        %v373 = vld [vmem:[#allocation5 + $0x338] sm:$0xff]
        %v374 = vld [vmem:[#allocation5 + $0x340] sm:$0xff]
        %v375 = vld [vmem:[#allocation5 + $0x348] sm:$0xff]
        %v376 = vld [vmem:[#allocation5 + $0x350] sm:$0xff]
        %v377 = vld [vmem:[#allocation5 + $0x358] sm:$0xff]
        %v378 = vld [vmem:[#allocation5 + $0x360] sm:$0xff]
        %v379 = vld [vmem:[#allocation5 + $0x368] sm:$0xff]
        %v380 = vld [vmem:[#allocation5 + $0x370] sm:$0xff]
        %v381 = vld [vmem:[#allocation5 + $0x378] sm:$0xff]
        %v382 = vld [vmem:[#allocation5 + $0x380] sm:$0xff]
        %v383 = vld [vmem:[#allocation5 + $0x388] sm:$0xff]
        %v384 = vld [vmem:[#allocation5 + $0x390] sm:$0xff]
        %v385 = vld [vmem:[#allocation5 + $0x398] sm:$0xff]
        %v386 = vld [vmem:[#allocation5 + $0x3a0] sm:$0xff]
        %v387 = vld [vmem:[#allocation5 + $0x3a8] sm:$0xff]
        %v388 = vld [vmem:[#allocation5 + $0x3b0] sm:$0xff]
        %v389 = vld [vmem:[#allocation5 + $0x3b8] sm:$0xff]
        %v390 = vld [vmem:[#allocation5 + $0x3c0] sm:$0xff]
        %v391 = vld [vmem:[#allocation5 + $0x3c8] sm:$0xff]
        %v392 = vld [vmem:[#allocation5 + $0x3d0] sm:$0xff]
        %v393 = vld [vmem:[#allocation5 + $0x3d8] sm:$0xff]
        %v394 = vld [vmem:[#allocation5 + $0x3e0] sm:$0xff]
        %v395 = vld [vmem:[#allocation5 + $0x3e8] sm:$0xff]
        %v396 = vld [vmem:[#allocation5 + $0x3f0] sm:$0xff]
        %v397 = vld [vmem:[#allocation5 + $0x3f8] sm:$0xff]
        %v398 = vld [vmem:[#allocation5 + $0x400] sm:$0xff]
        %v399 = vld [vmem:[#allocation5 + $0x408] sm:$0xff]
        %v400 = vld [vmem:[#allocation5 + $0x410] sm:$0xff]
        %v401 = vld [vmem:[#allocation5 + $0x418] sm:$0xff]
        %v402 = vld [vmem:[#allocation5 + $0x420] sm:$0xff]
        %v403 = vld [vmem:[#allocation5 + $0x428] sm:$0xff]
        %v404 = vld [vmem:[#allocation5 + $0x430] sm:$0xff]
        %v405 = vld [vmem:[#allocation5 + $0x438] sm:$0xff]
        %v406 = vld [vmem:[#allocation5 + $0x440] sm:$0xff]
        %v407 = vld [vmem:[#allocation5 + $0x448] sm:$0xff]
        %v408 = vld [vmem:[#allocation5 + $0x450] sm:$0xff]
        %v409 = vld [vmem:[#allocation5 + $0x458] sm:$0xff]
        %v410 = vld [vmem:[#allocation5 + $0x460] sm:$0xff]
        %v411 = vld [vmem:[#allocation5 + $0x468] sm:$0xff]
        %v412 = vld [vmem:[#allocation5 + $0x470] sm:$0xff]
        %v413 = vld [vmem:[#allocation5 + $0x478] sm:$0xff]
        %v414 = vld [vmem:[#allocation5 + $0x480] sm:$0xff]
        %v415 = vld [vmem:[#allocation5 + $0x488] sm:$0xff]
        %v416 = vld [vmem:[#allocation5 + $0x490] sm:$0xff]
        %v417 = vld [vmem:[#allocation5 + $0x498] sm:$0xff]
        %v418 = vld [vmem:[#allocation5 + $0x4a0] sm:$0xff]
        %v419 = vld [vmem:[#allocation5 + $0x4a8] sm:$0xff]
        %v420 = vld [vmem:[#allocation5 + $0x4b0] sm:$0xff]
        %v421 = vld [vmem:[#allocation5 + $0x4b8] sm:$0xff]
        %v422 = vld [vmem:[#allocation5 + $0x4c0] sm:$0xff]
        %v423 = vld [vmem:[#allocation5 + $0x4c8] sm:$0xff]
        %v424 = vld [vmem:[#allocation5 + $0x4d0] sm:$0xff]
        %v425 = vld [vmem:[#allocation5 + $0x4d8] sm:$0xff]
        %v426 = vld [vmem:[#allocation5 + $0x4e0] sm:$0xff]
        %v427 = vld [vmem:[#allocation5 + $0x4e8] sm:$0xff]
        %v428 = vld [vmem:[#allocation5 + $0x4f0] sm:$0xff]
        %v429 = vld [vmem:[#allocation5 + $0x4f8] sm:$0xff]
        %v430 = vld [vmem:[%s246] sm:$0x3]
        %v432 = vlaneseq
        %v433 = vshrl.u32 %v432, 7
        %v434 = vsub.s32 0, %v433
        %v435 = vrot.slane %v430, %v434
        %v436 = vlaneseq
        %v437 = vshrl.u32 %v436, 7
        %v438 = vsub.s32 1, %v437
        %v439 = vrot.slane %v430, %v438
        %442 = vmatprep.subr.mxu0 %v271
        %443 = vmatpush1.msra.mxu0 %v270
        %444 = vmatprep.subr.mxu0 %v273
        %445 = vmatpush1.msra.mxu0 %v272
        %446 = vmatprep.subr.mxu0 %v275
        %447 = vmatpush1.msra.mxu0 %v274
        %448 = vmatprep.subr.mxu0 %v277
        %449 = vmatpush1.msra.mxu0 %v276
        %450 = vmatprep.subr.mxu0 %v279
        %451 = vmatpush1.msra.mxu0 %v278
        %452 = vmatprep.subr.mxu0 %v281
        %453 = vmatpush1.msra.mxu0 %v280
        %454 = vmatprep.subr.mxu0 %v283
        %455 = vmatpush1.msra.mxu0 %v282
        %456 = vmatprep.subr.mxu0 %v285
        %457 = vmatpush1.msra.mxu0 %v284
        %458 = vmatprep.subr.mxu0 %v287
        %459 = vmatpush1.msra.mxu0 %v286
        %460 = vmatprep.subr.mxu0 %v289
        %461 = vmatpush1.msra.mxu0 %v288
        %462 = vmatprep.subr.mxu0 %v291
        %463 = vmatpush1.msra.mxu0 %v290
        %464 = vmatprep.subr.mxu0 %v293
        %465 = vmatpush1.msra.mxu0 %v292
        %466 = vmatprep.subr.mxu0 %v295
        %467 = vmatpush1.msra.mxu0 %v294
        %468 = vmatprep.subr.mxu0 %v297
        %469 = vmatpush1.msra.mxu0 %v296
        %470 = vmatprep.subr.mxu0 %v299
        %471 = vmatpush1.msra.mxu0 %v298
        %472 = vmatprep.subr.mxu0 %v301
        %473 = vmatpush1.msra.mxu0 %v300
        %474 = vmatprep.subr.mxu0 %v303
        %475 = vmatpush1.msra.mxu0 %v302
        %476 = vmatprep.subr.mxu0 %v305
        %477 = vmatpush1.msra.mxu0 %v304
        %478 = vmatprep.subr.mxu0 %v307
        %479 = vmatpush1.msra.mxu0 %v306
        %480 = vmatprep.subr.mxu0 %v309
        %481 = vmatpush1.msra.mxu0 %v308
        %482 = vmatprep.subr.mxu0 %v311
        %483 = vmatpush1.msra.mxu0 %v310
        %484 = vmatprep.subr.mxu0 %v313
        %485 = vmatpush1.msra.mxu0 %v312
        %486 = vmatprep.subr.mxu0 %v315
        %487 = vmatpush1.msra.mxu0 %v314
        %488 = vmatprep.subr.mxu0 %v317
        %489 = vmatpush1.msra.mxu0 %v316
        %490 = vmatprep.subr.mxu0 %v319
        %491 = vmatpush1.msra.mxu0 %v318
        %492 = vmatprep.subr.mxu0 %v321
        %493 = vmatpush1.msra.mxu0 %v320
        %494 = vmatprep.subr.mxu0 %v323
        %495 = vmatpush1.msra.mxu0 %v322
        %496 = vmatprep.subr.mxu0 %v325
        %497 = vmatpush1.msra.mxu0 %v324
        %498 = vmatprep.subr.mxu0 %v327
        %499 = vmatpush1.msra.mxu0 %v326
        %500 = vmatprep.subr.mxu0 %v329
        %501 = vmatpush1.msra.mxu0 %v328
        %502 = vmatprep.subr.mxu0 %v331
        %503 = vmatpush1.msra.mxu0 %v330
        %504 = vmatprep.subr.mxu0 %v333
        %505 = vmatpush1.msra.mxu0 %v332
        %506 = vmatprep.mubr.f32.mxu0 %v261
        %507 = vmatmul.mubr.f32.gmra.mrb[0].mxu0 %v260
        %v508 = vpop.f32.mrb[0].mxu0
        %v509 = vadd.f32 %v435, %v508
        %v510 = vpop.f32.mrb[0].mxu0
        %v511 = vadd.f32 %v439, %v510
        %512 = vmatprep.mubr.f32.mxu0 %v266
        %513 = vmatmul.mubr.f32.gmra.mrb[0].mxu0 %v265
        %v514 = vpop.f32.mrb[0].mxu0
        %v515 = vadd.f32 %v435, %v514
        %v516 = vpop.f32.mrb[0].mxu0
        %v517 = vadd.f32 %v439, %v516
        %518 = vdwg.mxu0
        %519 = vmatprep.subr.mxu0 %v335
        %520 = vmatpush1.msra.mxu0 %v334
        %521 = vmatprep.subr.mxu0 %v337
        %522 = vmatpush1.msra.mxu0 %v336
        %523 = vmatprep.subr.mxu0 %v339
        %524 = vmatpush1.msra.mxu0 %v338
        %525 = vmatprep.subr.mxu0 %v341
        %526 = vmatpush1.msra.mxu0 %v340
        %527 = vmatprep.subr.mxu0 %v343
        %528 = vmatpush1.msra.mxu0 %v342
        %529 = vmatprep.subr.mxu0 %v345
        %530 = vmatpush1.msra.mxu0 %v344
        %531 = vmatprep.subr.mxu0 %v347
        %532 = vmatpush1.msra.mxu0 %v346
        %533 = vmatprep.subr.mxu0 %v349
        %534 = vmatpush1.msra.mxu0 %v348
        %535 = vmatprep.subr.mxu0 %v351
        %536 = vmatpush1.msra.mxu0 %v350
        %537 = vmatprep.subr.mxu0 %v353
        %538 = vmatpush1.msra.mxu0 %v352
        %539 = vmatprep.subr.mxu0 %v355
        %540 = vmatpush1.msra.mxu0 %v354
        %541 = vmatprep.subr.mxu0 %v357
        %542 = vmatpush1.msra.mxu0 %v356
        %543 = vmatprep.subr.mxu0 %v359
        %544 = vmatpush1.msra.mxu0 %v358
        %545 = vmatprep.subr.mxu0 %v361
        %546 = vmatpush1.msra.mxu0 %v360
        %547 = vmatprep.subr.mxu0 %v363
        %548 = vmatpush1.msra.mxu0 %v362
        %549 = vmatprep.subr.mxu0 %v365
        %550 = vmatpush1.msra.mxu0 %v364
        %551 = vmatprep.subr.mxu0 %v367
        %552 = vmatpush1.msra.mxu0 %v366
        %553 = vmatprep.subr.mxu0 %v369
        %554 = vmatpush1.msra.mxu0 %v368
        %555 = vmatprep.subr.mxu0 %v371
        %556 = vmatpush1.msra.mxu0 %v370
        %557 = vmatprep.subr.mxu0 %v373
        %558 = vmatpush1.msra.mxu0 %v372
        %559 = vmatprep.subr.mxu0 %v375
        %560 = vmatpush1.msra.mxu0 %v374
        %561 = vmatprep.subr.mxu0 %v377
        %562 = vmatpush1.msra.mxu0 %v376
        %563 = vmatprep.subr.mxu0 %v379
        %564 = vmatpush1.msra.mxu0 %v378
        %565 = vmatprep.subr.mxu0 %v381
        %566 = vmatpush1.msra.mxu0 %v380
        %567 = vmatprep.subr.mxu0 %v383
        %568 = vmatpush1.msra.mxu0 %v382
        %569 = vmatprep.subr.mxu0 %v385
        %570 = vmatpush1.msra.mxu0 %v384
        %571 = vmatprep.subr.mxu0 %v387
        %572 = vmatpush1.msra.mxu0 %v386
        %573 = vmatprep.subr.mxu0 %v389
        %574 = vmatpush1.msra.mxu0 %v388
        %575 = vmatprep.subr.mxu0 %v391
        %576 = vmatpush1.msra.mxu0 %v390
        %577 = vmatprep.subr.mxu0 %v393
        %578 = vmatpush1.msra.mxu0 %v392
        %579 = vmatprep.subr.mxu0 %v395
        %580 = vmatpush1.msra.mxu0 %v394
        %581 = vmatprep.subr.mxu0 %v397
        %582 = vmatpush1.msra.mxu0 %v396
        %583 = vmatprep.mubr.f32.mxu0 %v263
        %584 = vmatmul.mubr.f32.gmra.mrb[0].mxu0 %v262
        %v585 = vpop.f32.mrb[0].mxu0
        %v586 = vadd.f32 %v509, %v585
        %v587 = vpop.f32.mrb[0].mxu0
        %v588 = vadd.f32 %v511, %v587
        %589 = vmatprep.mubr.f32.mxu0 %v268
        %590 = vmatmul.mubr.f32.gmra.mrb[0].mxu0 %v267
        %v591 = vpop.f32.mrb[0].mxu0
        %v592 = vadd.f32 %v515, %v591
        %v593 = vpop.f32.mrb[0].mxu0
        %v594 = vadd.f32 %v517, %v593
        %595 = vdwg.mxu0
        %596 = vmatprep.subr.mxu0 %v399
        %597 = vmatpush1.msra.mxu0 %v398
        %598 = vmatprep.subr.mxu0 %v401
        %599 = vmatpush1.msra.mxu0 %v400
        %600 = vmatprep.subr.mxu0 %v403
        %601 = vmatpush1.msra.mxu0 %v402
        %602 = vmatprep.subr.mxu0 %v405
        %603 = vmatpush1.msra.mxu0 %v404
        %604 = vmatprep.subr.mxu0 %v407
        %605 = vmatpush1.msra.mxu0 %v406
        %606 = vmatprep.subr.mxu0 %v409
        %607 = vmatpush1.msra.mxu0 %v408
        %608 = vmatprep.subr.mxu0 %v411
        %609 = vmatpush1.msra.mxu0 %v410
        %610 = vmatprep.subr.mxu0 %v413
        %611 = vmatpush1.msra.mxu0 %v412
        %612 = vmatprep.subr.mxu0 %v415
        %613 = vmatpush1.msra.mxu0 %v414
        %614 = vmatprep.subr.mxu0 %v417
        %615 = vmatpush1.msra.mxu0 %v416
        %616 = vmatprep.subr.mxu0 %v419
        %617 = vmatpush1.msra.mxu0 %v418
        %618 = vmatprep.subr.mxu0 %v421
        %619 = vmatpush1.msra.mxu0 %v420
        %620 = vmatprep.subr.mxu0 %v423
        %621 = vmatpush1.msra.mxu0 %v422
        %622 = vmatprep.subr.mxu0 %v425
        %623 = vmatpush1.msra.mxu0 %v424
        %624 = vmatprep.subr.mxu0 %v427
        %625 = vmatpush1.msra.mxu0 %v426
        %626 = vmatprep.subr.mxu0 %v429
        %627 = vmatpush1.msra.mxu0 %v428
        %628 = vmatprep.subr.mxu0 0.0
        %629 = vmatpush1.msra.mxu0 0.0
        %630 = vmatprep.subr.mxu0 0.0
        %631 = vmatpush1.msra.mxu0 0.0
        %632 = vmatprep.subr.mxu0 0.0
        %633 = vmatpush1.msra.mxu0 0.0
        %634 = vmatprep.subr.mxu0 0.0
        %635 = vmatpush1.msra.mxu0 0.0
        %636 = vmatprep.subr.mxu0 0.0
        %637 = vmatpush1.msra.mxu0 0.0
        %638 = vmatprep.subr.mxu0 0.0
        %639 = vmatpush1.msra.mxu0 0.0
        %640 = vmatprep.subr.mxu0 0.0
        %641 = vmatpush1.msra.mxu0 0.0
        %642 = vmatprep.subr.mxu0 0.0
        %643 = vmatpush1.msra.mxu0 0.0
        %644 = vmatprep.subr.mxu0 0.0
        %645 = vmatpush1.msra.mxu0 0.0
        %646 = vmatprep.subr.mxu0 0.0
        %647 = vmatpush1.msra.mxu0 0.0
        %648 = vmatprep.subr.mxu0 0.0
        %649 = vmatpush1.msra.mxu0 0.0
        %650 = vmatprep.subr.mxu0 0.0
        %651 = vmatpush1.msra.mxu0 0.0
        %652 = vmatprep.subr.mxu0 0.0
        %653 = vmatpush1.msra.mxu0 0.0
        %654 = vmatprep.subr.mxu0 0.0
        %655 = vmatpush1.msra.mxu0 0.0
        %656 = vmatprep.subr.mxu0 0.0
        %657 = vmatpush1.msra.mxu0 0.0
        %658 = vmatprep.subr.mxu0 0.0
        %659 = vmatpush1.msra.mxu0 0.0
        %660 = vmatprep.mubr.f32.mxu0 0.0
        %661 = vmatmul.mubr.f32.gmra.mrb[0].mxu0 %v264
        %v662 = vpop.f32.mrb[0].mxu0
        %v663 = vadd.f32 %v586, %v662
        %v664 = vpop.f32.mrb[0].mxu0
        %v665 = vadd.f32 %v588, %v664
        %666 = vmatprep.mubr.f32.mxu0 0.0
        %667 = vmatmul.mubr.f32.gmra.mrb[0].mxu0 %v269
        %v668 = vpop.f32.mrb[0].mxu0
        %v669 = vadd.f32 %v592, %v668
        %v670 = vpop.f32.mrb[0].mxu0
        %v671 = vadd.f32 %v594, %v670
        %672 = vdwg.mxu0
        %673 = vst [vmem:[%s240] sm:$0xff] %v663
        %674 = vst [vmem:[%s240 + $0x8] sm:$0xff] %v665
        %675 = vst [vmem:[%s240 + $0x10] sm:$0xff] %v669
        %676 = vst [vmem:[%s240 + $0x18] sm:$0xff] %v671
        %s677 = sand.u32 %s121, 1
        %s678 = scalar_lea.sflag [#allocation4], %s677
        %s679 = sand.u32 %s121, 1
        %s680 = smul.addr %s679, 32
        %s681 = scalar_lea.vmem [#allocation7], %s680
        // Predicated region
        $region41: #{tpu_custom_call.1} parent=31 // pred_check
          %p682 = pneg %p131
        $region42: #{tpu_custom_call.1} parent=31 // pred_check_branch
          %684 = sbr.rel (%p682) target = $region44
        $region43: #{tpu_custom_call.1} parent=31 // pred_region
          %s685 = smul.u32 2, %s25
          %s686 = smul.u32 2, %s26
          %s688 = ssub.s32 512, 512
          %689 = vsyncadd %s678, %s688
          %s690 = smul.addr %s685, 2
          %s691 = sadd.s32 %s686, %s690
          %s692 = smul.addr %s691, 128
          %s693 = scalar_lea.hbm %s3, %s692
          %s694 = sshll.u32 %s681, 4
          %s695 = int_to_ptr.vmem [resolvable:$true] %s694
          %700 = dma.vmem_to_hbm [thread:$0]  %s695, 512, %s693, %s678, 256, 256, 16
        $region44: #{tpu_custom_call.1} parent=31 // pred_fallthru
          _
      $region32: #{tpu_custom_call.1} parent=5 // pred_fallthru
        _
      %p701 = scmp.le.s32.totalorder 2, %s16
      // Predicated region
      $region45: #{tpu_custom_call.1} parent=5 // pred_check
        %p702 = pneg %p701
      $region46: #{tpu_custom_call.1} parent=5 // pred_check_branch
        %704 = sbr.rel (%p702) target = $region48
      $region47: #{tpu_custom_call.1} parent=5 // pred_region
        %s705 = ssub.s32 %s16, 2
        // Predicated region
        $region49: #{tpu_custom_call.1} parent=47 // pred_check
          %p706 = pneg %p137
        $region50: #{tpu_custom_call.1} parent=47 // pred_check_branch
          %708 = sbr.rel (%p706) target = $region52
        $region51: #{tpu_custom_call.1} parent=47 // pred_region
          %s709 = sand.u32 %s122, 1
          %s710 = scalar_lea.sflag [#allocation4], %s709
          %s711 = sand.u32 %s122, 1
          %s712 = smul.addr %s711, 32
          %s713 = scalar_lea.vmem [#allocation7], %s712
          %714 = dma.done %s710, 512
        $region52: #{tpu_custom_call.1} parent=47 // pred_fallthru
          _
      $region48: #{tpu_custom_call.1} parent=5 // pred_fallthru
        _
    $region6: #{tpu_custom_call.1} parent=1 // loop_footer
      %s20 = sadd.s32 1, %s16
    $region7: #{tpu_custom_call.1} parent=1 // loop_footer_branch
      %15 = sbr.rel target = $region3
    $region8: #{tpu_custom_call.1} parent=1 // loop_exit
      _
    %715 = vsyncpa [#allocation3], 1
    %s716 = scalar_lea.sflag [#allocation3], 1
    %717 = vsyncpa %s716, 1
    %718 = vsyncpa [#allocation6], 1
    %719 = vsyncpa [#allocation4], 1
    %s720 = scalar_lea.sflag [#allocation4], 1
    %721 = vsyncpa %s720, 1

</llo_original>
